<compile_context>
chip_gen: v5e
topology: v5e:2x2
jax: 0.10.0
libtpu: 0.0.40
codegen_flags: <defaults>
</compile_context>

<pallas_src>
import jax
import jax.numpy as jnp
from jax import lax
from jax.experimental import pallas as pl
from jax.experimental.pallas import tpu as pltpu


# -----------------------------------------------------------------------------
# Kernel
# -----------------------------------------------------------------------------
def _weaver_kernel(x_ref, w1_ref, b1_ref, w2_ref, b2_ref, a_ref, bp_ref,
                   out_ref, stats_ref):
    """Fused instance-norm(L) -> fc1 -> SiLU -> fc2 -> a/b mix -> transpose."""
    x = x_ref[...]                                        # (BB, L, C) f32
    BB, L, C = x.shape

    # --- instance normalization over the sequence axis (torch dim=1) --------
    mean = jnp.mean(x, axis=1, keepdims=True)             # (BB, 1, C)
    xm = x - mean                                         # centered, reused
    var = jnp.mean(xm * xm, axis=1, keepdims=True)        # biased (unbiased=False)
    std = jnp.maximum(jnp.sqrt(var), jnp.float32(0.01))   # == where(std>0.01, std, 0.01)
    # rsqrt runs on the EUP slot; mathematically identical to 1/max(std, 0.01).
    inv_std = lax.rsqrt(jnp.maximum(var, jnp.float32(1e-4)))
    xn = xm * inv_std                                     # (BB, L, C)

    # --- FeatureWeaver: fc1 -> SiLU -> dropout(p=0.1, train=False) -> fc2 ---
    # Inference: dropout is identity, so both feature_weaver() calls in the
    # PyTorch forward are identical -> computed once.
    # TODO(synk): training-mode dropout (two independent masks) not implemented.
    w1 = w1_ref[...]
    w2 = w2_ref[...]
    xn2 = xn.reshape(BB * L, C)                            # one big MXU row block
    h = jnp.dot(xn2.astype(w1.dtype), w1,
                preferred_element_type=jnp.float32) + b1_ref[...]
    h = h * jax.nn.sigmoid(h)                              # SiLU (EUP sigmoid)
    w_out = (jnp.dot(h.astype(w2.dtype), w2,
                     preferred_element_type=jnp.float32)
             + b2_ref[...]).reshape(BB, L, C)

    # --- a/b mixing + fused cat/permute writeback ----------------------------
    a = a_ref[...]                                         # (1, C)
    bp = bp_ref[...]                                       # (1, C)
    x1 = a * xn + w_out
    x2 = -bp * xn + w_out
    out_ref[0] = jnp.swapaxes(x1, 1, 2)                    # (BB, C, L), XLU transpose
    out_ref[1] = jnp.swapaxes(x2, 1, 2)
    # mean & std share one (BB, 2, C) output block -> single small DMA per step.
    stats_ref[:, 0:1, :] = mean
    stats_ref[:, 1:2, :] = std


# -----------------------------------------------------------------------------
# Block sizing (padding-aware, generation-aware)
# -----------------------------------------------------------------------------
def _cdiv(a, b):
    return -(-a // b)


def _round_up(n, m):
    return _cdiv(n, m) * m


def _padded_f32_bytes(shape):
    """f32 VMEM footprint with (8, 128) tile padding of the last two dims."""
    shape = tuple(shape)
    if len(shape) == 1:
        shape = (1,) + shape
    lead = 1
    for d in shape[:-2]:
        lead *= d
    return 4 * lead * _round_up(shape[-2], 8) * _round_up(shape[-1], 128)


def _step_vmem_bytes(bb, L, C, H):
    """Per-grid-step VMEM estimate: pipelined blocks and constant weight blocks
    are double buffered (x2); compiler intermediates live once."""
    pipelined = (_padded_f32_bytes((bb, L, C))             # batch_x block
                 + _padded_f32_bytes((2, bb, C, L))        # fused output block
                 + _padded_f32_bytes((bb, 2, C)))          # mean/std block
    weights = (_padded_f32_bytes((C, H)) + _padded_f32_bytes((1, H))
               + _padded_f32_bytes((H, C)) + 3 * _padded_f32_bytes((1, C)))
    intermediates = (4 * _padded_f32_bytes((bb, L, C))     # xn, w_out, x1, x2
                     + _padded_f32_bytes((bb * L, H))      # h
                     + 2 * _padded_f32_bytes((bb, C, L)))  # transposed x1/x2
    return 2 * (pipelined + weights) + intermediates


def _vmem_caps():
    """(physical VMEM bytes, generation-aware scoped limit bytes)."""
    try:
        phys = int(pltpu.get_tpu_info().vmem_capacity_bytes)
    except Exception:  # non-queryable: assume v7x (smallest per-core VMEM)
        phys = 64 * 1024 * 1024
    # ~64 MiB on v5e/v6e (128 MiB physical), ~32 MiB on v7x (64 MiB physical).
    return phys, min(phys // 2, 64 * 1024 * 1024)


def _pick_batch_block(B, L, C, H, budget):
    """Largest batch block fitting `budget`, with >= 2 balanced grid steps
    whenever B >= 2 (megacore sharding + DMA/compute overlap)."""
    bb = _cdiv(B, 2) if B >= 2 else B
    while bb > 1 and _step_vmem_bytes(bb, L, C, H) > budget:
        bb -= 1
    nb = _cdiv(B, bb)
    bb = _cdiv(B, nb)          # rebalance: avoid a tiny trailing block
    nb = _cdiv(B, bb)
    return bb, nb


# -----------------------------------------------------------------------------
# Wrapper
# -----------------------------------------------------------------------------
def weaver_forward(batch_x, w1, b1, w2, b2, a, b, *, matmul_dtype=None):
    """batch_x: (B, L, C) float32.

    Returns (ltm_input (2*B*C, L), means (B,1,C), stdev (B,1,C)) — exactly the
    tensors Model.forward feeds to / keeps for the external `ltm` LLM.

    matmul_dtype: optionally cast the two MXU matmuls' operands (e.g.
    jnp.bfloat16) to hit the native MXU datapath; accumulation stays f32.
    """
    B, L, C = batch_x.shape
    H = w1.shape[1]

    if matmul_dtype is not None:
        w1 = w1.astype(matmul_dtype)
        w2 = w2.astype(matmul_dtype)

    phys_vmem, vmem_limit = _vmem_caps()
    BB, nb = _pick_batch_block(B, L, C, H, budget=int(0.75 * vmem_limit))
    vmem_limit = min(phys_vmem,
                     max(vmem_limit, int(1.25 * _step_vmem_bytes(BB, L, C, H))))

    full = lambda shape: pl.BlockSpec(shape, lambda i: (0,) * len(shape))
    # NOTE: pipeline_mode=pl.Buffered(1) on the constant-index weight specs
    # would drop their duplicate pipeline buffer (extra v7x VMEM saving);
    # left at the default here for portability across jax versions.

    out, stats = pl.pallas_call(
        _weaver_kernel,
        out_shape=(
            # Fused cat([x1,x2],0).permute(0,2,1) layout. For lane-dense
            # (unmasked) output stores, use a production L that is a multiple
            # of 128; small L keeps correctness but masks the vst lanes.
            jax.ShapeDtypeStruct((2, B, C, L), jnp.float32),
            jax.ShapeDtypeStruct((B, 2, C), jnp.float32),     # [mean; std]
        ),
        grid_spec=pltpu.PrefetchScalarGridSpec(
            num_scalar_prefetch=0,
            grid=(nb,),                                       # cdiv: any B works
            in_specs=[
                pl.BlockSpec((BB, L, C), lambda i: (i, 0, 0)),  # batch_x block
                full((C, H)),   # fc1.weight.T
                full((1, H)),   # fc1.bias
                full((H, C)),   # fc2.weight.T
                full((1, C)),   # fc2.bias
                full((1, C)),   # a
                full((1, C)),   # b
            ],
            out_specs=[
                pl.BlockSpec((2, BB, C, L), lambda i: (0, i, 0, 0)),
                pl.BlockSpec((BB, 2, C), lambda i: (i, 0, 0)),
            ],
        ),
        compiler_params=pltpu.CompilerParams(
            dimension_semantics=("parallel",),
            vmem_limit_bytes=int(vmem_limit),
        ),
    )(batch_x, w1, b1, w2, b2, a, b)

    # (2, B, C, L) is exactly cat([x1,x2],0).permute(0,2,1) laid out
    # contiguously -> this reshape is free (no data movement).
    ltm_input = out.reshape(2 * B * C, L)
    means = stats[:, 0:1, :]
    stdev = stats[:, 1:2, :]
    # TODO(synk): self.ltm (timer/sundial generate / loss) is an external LLM
    # with no Pallas equivalent; the forward stops at the tensor fed to it.
    return ltm_input, means, stdev


# -----------------------------------------------------------------------------
# Reference + self-test
# -----------------------------------------------------------------------------
def _reference(batch_x, w1, b1, w2, b2, a, b):
    mean = jnp.mean(batch_x, axis=1, keepdims=True)
    std = jnp.sqrt(jnp.mean((batch_x - mean) ** 2, axis=1, keepdims=True))
    std = jnp.where(std > 0.01, std, 0.01)
    xn = (batch_x - mean) / std
    h = xn @ w1 + b1
    h = h * jax.nn.sigmoid(h)
    w_out = h @ w2 + b2
    x1 = a * xn + w_out
    x2 = -b * xn + w_out
    cat = jnp.concatenate([x1, x2], axis=0)
    L = batch_x.shape[1]
    return jnp.transpose(cat, (0, 2, 1)).reshape(-1, L), mean, std


def _run_case(B, L, C, H, key, matmul_dtype, atol, rtol):
    kx, k1, k2, k3, k4 = jax.random.split(key, 5)
    batch_x = jax.random.normal(kx, (B, L, C), dtype=jnp.float32)
    w1 = jax.random.normal(k1, (C, H), dtype=jnp.float32) * 0.05   # fc1.weight.T
    b1 = jax.random.normal(k2, (1, H), dtype=jnp.float32) * 0.05   # fc1.bias
    w2 = jax.random.normal(k3, (H, C), dtype=jnp.float32) * 0.05   # fc2.weight.T
    b2 = jax.random.normal(k4, (1, C), dtype=jnp.float32) * 0.05   # fc2.bias
    a = jnp.ones((1, C), dtype=jnp.float32)                        # Model.a
    b = jnp.ones((1, C), dtype=jnp.float32)                        # Model.b

    out, means, stdev = jax.block_until_ready(
        weaver_forward(batch_x, w1, b1, w2, b2, a, b, matmul_dtype=matmul_dtype))
    ref_out, ref_means, ref_std = _reference(batch_x, w1, b1, w2, b2, a, b)

    assert out.shape == (2 * B * C, L)
    assert jnp.allclose(out, ref_out, atol=atol, rtol=rtol)
    assert jnp.allclose(means, ref_means, atol=1e-5, rtol=1e-5)
    assert jnp.allclose(stdev, ref_std, atol=1e-5, rtol=1e-5)


if __name__ == "__main__":
    key = jax.random.PRNGKey(0)
    k0, k1 = jax.random.split(key)
    # batch=2, seq=16, input_channel=32, output_channel=64 — full f32 precision.
    _run_case(B=2, L=16, C=32, H=64, key=k0, matmul_dtype=None,
              atol=1e-4, rtol=1e-4)
    # Non-divisor batch (cdiv grid with a masked trailing block) + bf16 matmul
    # operands / f32 accumulation (looser tolerance).
    _run_case(B=3, L=16, C=32, H=64, key=k1, matmul_dtype=jnp.bfloat16,
              atol=2e-2, rtol=2e-2)
    print("KERNEL_OK")
</pallas_src>

<mosaic_0001>
module attributes {stable_mosaic.version = 11 : i64} {
  func.func @_weaver_kernel(%arg0: i32, %arg1: memref<1x16x32xf32, #tpu.memory_space<vmem>>, %arg2: memref<32x64xf32, #tpu.memory_space<vmem>>, %arg3: memref<1x64xf32, #tpu.memory_space<vmem>>, %arg4: memref<64x32xf32, #tpu.memory_space<vmem>>, %arg5: memref<1x32xf32, #tpu.memory_space<vmem>>, %arg6: memref<1x32xf32, #tpu.memory_space<vmem>>, %arg7: memref<1x32xf32, #tpu.memory_space<vmem>>, %arg8: memref<2x1x32x16xf32, #tpu.memory_space<vmem>>, %arg9: memref<1x2x32xf32, #tpu.memory_space<vmem>>) attributes {dimension_semantics = [#tpu.dimension_semantics<parallel>], iteration_bounds = array<i64: 2>, scalar_prefetch = 0 : i64, scratch_operands = 0 : i64, tpu.core_type = #tpu.core_type<tc>, window_params = [{transform_indices = @transform_0, window_bounds = array<i64: 1, 16, 32>}, {pipeline_mode = #tpu.pipeline_mode<synchronous>, transform_indices = @transform_1, window_bounds = array<i64: 32, 64>}, {pipeline_mode = #tpu.pipeline_mode<synchronous>, transform_indices = @transform_2, window_bounds = array<i64: 1, 64>}, {pipeline_mode = #tpu.pipeline_mode<synchronous>, transform_indices = @transform_3, window_bounds = array<i64: 64, 32>}, {pipeline_mode = #tpu.pipeline_mode<synchronous>, transform_indices = @transform_4, window_bounds = array<i64: 1, 32>}, {pipeline_mode = #tpu.pipeline_mode<synchronous>, transform_indices = @transform_5, window_bounds = array<i64: 1, 32>}, {pipeline_mode = #tpu.pipeline_mode<synchronous>, transform_indices = @transform_6, window_bounds = array<i64: 1, 32>}, {transform_indices = @transform_7, window_bounds = array<i64: 2, 1, 32, 16>}, {transform_indices = @transform_8, window_bounds = array<i64: 1, 2, 32>}]} {
    %c0 = arith.constant 0 : index
    %c0_0 = arith.constant 0 : index
    %c0_1 = arith.constant 0 : index
    %0 = vector.load %arg1[%c0, %c0_0, %c0_1] : memref<1x16x32xf32, #tpu.memory_space<vmem>>, vector<1x16x32xf32>
    %cst = arith.constant dense<0.000000e+00> : vector<1x32xf32>
    %1 = vector.multi_reduction <add>, %0, %cst [1] : vector<1x16x32xf32> to vector<1x32xf32>
    %2 = vector.shape_cast %1 : vector<1x32xf32> to vector<1x1x32xf32>
    %cst_2 = arith.constant 1.600000e+01 : f32
    %3 = vector.broadcast %cst_2 : f32 to vector<1x1x32xf32>
    %4 = arith.divf %2, %3 : vector<1x1x32xf32>
    %5 = vector.broadcast %4 : vector<1x1x32xf32> to vector<1x16x32xf32>
    %6 = arith.subf %0, %5 : vector<1x16x32xf32>
    %7 = arith.mulf %6, %6 : vector<1x16x32xf32>
    %cst_3 = arith.constant dense<0.000000e+00> : vector<1x32xf32>
    %8 = vector.multi_reduction <add>, %7, %cst_3 [1] : vector<1x16x32xf32> to vector<1x32xf32>
    %9 = vector.shape_cast %8 : vector<1x32xf32> to vector<1x1x32xf32>
    %cst_4 = arith.constant 1.600000e+01 : f32
    %10 = vector.broadcast %cst_4 : f32 to vector<1x1x32xf32>
    %11 = arith.divf %9, %10 : vector<1x1x32xf32>
    %12 = math.sqrt %11 : vector<1x1x32xf32>
    %cst_5 = arith.constant 0.00999999977 : f32
    %13 = vector.broadcast %cst_5 : f32 to vector<1x1x32xf32>
    %14 = arith.maximumf %12, %13 : vector<1x1x32xf32>
    %cst_6 = arith.constant 9.99999974E-5 : f32
    %15 = vector.broadcast %cst_6 : f32 to vector<1x1x32xf32>
    %16 = arith.maximumf %11, %15 : vector<1x1x32xf32>
    %17 = math.rsqrt %16 : vector<1x1x32xf32>
    %18 = vector.broadcast %17 : vector<1x1x32xf32> to vector<1x16x32xf32>
    %19 = arith.mulf %6, %18 : vector<1x16x32xf32>
    %c0_7 = arith.constant 0 : index
    %c0_8 = arith.constant 0 : index
    %20 = vector.load %arg2[%c0_7, %c0_8] : memref<32x64xf32, #tpu.memory_space<vmem>>, vector<32x64xf32>
    %c0_9 = arith.constant 0 : index
    %c0_10 = arith.constant 0 : index
    %21 = vector.load %arg4[%c0_9, %c0_10] : memref<64x32xf32, #tpu.memory_space<vmem>>, vector<64x32xf32>
    %22 = vector.shape_cast %19 : vector<1x16x32xf32> to vector<16x32xf32>
    %cst_11 = arith.constant dense<0.000000e+00> : vector<16x64xf32>
    %23 = tpu.matmul %22, %20, %cst_11 {dimension_numbers = #tpu.dot_dimension_numbers<[1], [0], [0], [1], [0, 0, 1, 1], [], []>} : vector<16x32xf32>, vector<32x64xf32>, vector<16x64xf32> -> vector<16x64xf32>
    %c0_12 = arith.constant 0 : index
    %c0_13 = arith.constant 0 : index
    %24 = vector.load %arg3[%c0_12, %c0_13] : memref<1x64xf32, #tpu.memory_space<vmem>>, vector<1x64xf32>
    %25 = vector.broadcast %24 : vector<1x64xf32> to vector<16x64xf32>
    %26 = arith.addf %23, %25 : vector<16x64xf32>
    %27 = arith.negf %26 : vector<16x64xf32>
    %28 = math.exp %27 : vector<16x64xf32>
    %cst_14 = arith.constant 1.000000e+00 : f32
    %29 = vector.broadcast %cst_14 : f32 to vector<16x64xf32>
    %30 = arith.addf %29, %28 : vector<16x64xf32>
    %31 = arith.divf %29, %30 : vector<16x64xf32>
    %32 = arith.mulf %26, %31 : vector<16x64xf32>
    %cst_15 = arith.constant dense<0.000000e+00> : vector<16x32xf32>
    %33 = tpu.matmul %32, %21, %cst_15 {dimension_numbers = #tpu.dot_dimension_numbers<[1], [0], [0], [1], [0, 0, 1, 1], [], []>} : vector<16x64xf32>, vector<64x32xf32>, vector<16x32xf32> -> vector<16x32xf32>
    %c0_16 = arith.constant 0 : index
    %c0_17 = arith.constant 0 : index
    %34 = vector.load %arg5[%c0_16, %c0_17] : memref<1x32xf32, #tpu.memory_space<vmem>>, vector<1x32xf32>
    %35 = vector.broadcast %34 : vector<1x32xf32> to vector<16x32xf32>
    %36 = arith.addf %33, %35 : vector<16x32xf32>
    %37 = vector.shape_cast %36 : vector<16x32xf32> to vector<1x16x32xf32>
    %c0_18 = arith.constant 0 : index
    %c0_19 = arith.constant 0 : index
    %38 = vector.load %arg6[%c0_18, %c0_19] : memref<1x32xf32, #tpu.memory_space<vmem>>, vector<1x32xf32>
    %c0_20 = arith.constant 0 : index
    %c0_21 = arith.constant 0 : index
    %39 = vector.load %arg7[%c0_20, %c0_21] : memref<1x32xf32, #tpu.memory_space<vmem>>, vector<1x32xf32>
    %40 = vector.shape_cast %38 : vector<1x32xf32> to vector<1x1x32xf32>
    %41 = vector.broadcast %40 : vector<1x1x32xf32> to vector<1x16x32xf32>
    %42 = arith.mulf %41, %19 : vector<1x16x32xf32>
    %43 = arith.addf %42, %37 : vector<1x16x32xf32>
    %cst_22 = arith.constant 0.000000e+00 : f32
    %44 = vector.broadcast %cst_22 : f32 to vector<1x32xf32>
    %45 = arith.subf %44, %39 : vector<1x32xf32>
    %46 = vector.shape_cast %45 : vector<1x32xf32> to vector<1x1x32xf32>
    %47 = vector.broadcast %46 : vector<1x1x32xf32> to vector<1x16x32xf32>
    %48 = arith.mulf %47, %19 : vector<1x16x32xf32>
    %49 = arith.addf %48, %37 : vector<1x16x32xf32>
    %50 = tpu.transpose %43, [0, 2, 1] : vector<1x16x32xf32> -> vector<1x32x16xf32>
    %c0_23 = arith.constant 0 : index
    %c0_24 = arith.constant 0 : index
    %c0_25 = arith.constant 0 : index
    %c0_26 = arith.constant 0 : index
    %51 = vector.load %arg8[%c0_23, %c0_24, %c0_25, %c0_26] : memref<2x1x32x16xf32, #tpu.memory_space<vmem>>, vector<1x1x32x16xf32>
    %52 = vector.shape_cast %51 : vector<1x1x32x16xf32> to vector<1x32x16xf32>
    %53 = vector.shape_cast %50 : vector<1x32x16xf32> to vector<1x1x32x16xf32>
    tpu.vector_store %arg8[%c0_23, %c0_24, %c0_25, %c0_26], %53 {strides = array<i32>} : memref<2x1x32x16xf32, #tpu.memory_space<vmem>>, vector<1x1x32x16xf32>,
    %54 = tpu.transpose %49, [0, 2, 1] : vector<1x16x32xf32> -> vector<1x32x16xf32>
    %c1 = arith.constant 1 : index
    %c0_27 = arith.constant 0 : index
    %c0_28 = arith.constant 0 : index
    %c0_29 = arith.constant 0 : index
    %55 = vector.load %arg8[%c1, %c0_27, %c0_28, %c0_29] : memref<2x1x32x16xf32, #tpu.memory_space<vmem>>, vector<1x1x32x16xf32>
    %56 = vector.shape_cast %55 : vector<1x1x32x16xf32> to vector<1x32x16xf32>
    %57 = vector.shape_cast %54 : vector<1x32x16xf32> to vector<1x1x32x16xf32>
    tpu.vector_store %arg8[%c1, %c0_27, %c0_28, %c0_29], %57 {strides = array<i32>} : memref<2x1x32x16xf32, #tpu.memory_space<vmem>>, vector<1x1x32x16xf32>,
    %c0_30 = arith.constant 0 : index
    %c0_31 = arith.constant 0 : index
    %c0_32 = arith.constant 0 : index
    %58 = vector.load %arg9[%c0_30, %c0_31, %c0_32] : memref<1x2x32xf32, #tpu.memory_space<vmem>>, vector<1x1x32xf32>
    tpu.vector_store %arg9[%c0_30, %c0_31, %c0_32], %4 {strides = array<i32>} : memref<1x2x32xf32, #tpu.memory_space<vmem>>, vector<1x1x32xf32>,
    %c0_33 = arith.constant 0 : index
    %c1_34 = arith.constant 1 : index
    %c0_35 = arith.constant 0 : index
    %59 = vector.load %arg9[%c0_33, %c1_34, %c0_35] : memref<1x2x32xf32, #tpu.memory_space<vmem>>, vector<1x1x32xf32>
    tpu.vector_store %arg9[%c0_33, %c1_34, %c0_35], %14 {strides = array<i32>} : memref<1x2x32xf32, #tpu.memory_space<vmem>>, vector<1x1x32xf32>,
    return
  }
  func.func @transform_0(%arg0: i32) -> (i32, i32, i32) {
    %c0_i32 = arith.constant 0 : i32
    %c0_i32_0 = arith.constant 0 : i32
    %c0_i32_1 = arith.constant 0 : i32
    return %arg0, %c0_i32, %c0_i32_0 : i32, i32, i32
  }
  func.func @transform_1(%arg0: i32) -> (i32, i32) {
    %c0_i32 = arith.constant 0 : i32
    %c0_i32_0 = arith.constant 0 : i32
    %c0_i32_1 = arith.constant 0 : i32
    return %c0_i32, %c0_i32_0 : i32, i32
  }
  func.func @transform_2(%arg0: i32) -> (i32, i32) {
    %c0_i32 = arith.constant 0 : i32
    %c0_i32_0 = arith.constant 0 : i32
    %c0_i32_1 = arith.constant 0 : i32
    return %c0_i32, %c0_i32_0 : i32, i32
  }
  func.func @transform_3(%arg0: i32) -> (i32, i32) {
    %c0_i32 = arith.constant 0 : i32
    %c0_i32_0 = arith.constant 0 : i32
    %c0_i32_1 = arith.constant 0 : i32
    return %c0_i32, %c0_i32_0 : i32, i32
  }
  func.func @transform_4(%arg0: i32) -> (i32, i32) {
    %c0_i32 = arith.constant 0 : i32
    %c0_i32_0 = arith.constant 0 : i32
    %c0_i32_1 = arith.constant 0 : i32
    return %c0_i32, %c0_i32_0 : i32, i32
  }
  func.func @transform_5(%arg0: i32) -> (i32, i32) {
    %c0_i32 = arith.constant 0 : i32
    %c0_i32_0 = arith.constant 0 : i32
    %c0_i32_1 = arith.constant 0 : i32
    return %c0_i32, %c0_i32_0 : i32, i32
  }
  func.func @transform_6(%arg0: i32) -> (i32, i32) {
    %c0_i32 = arith.constant 0 : i32
    %c0_i32_0 = arith.constant 0 : i32
    %c0_i32_1 = arith.constant 0 : i32
    return %c0_i32, %c0_i32_0 : i32, i32
  }
  func.func @transform_7(%arg0: i32) -> (i32, i32, i32, i32) {
    %c0_i32 = arith.constant 0 : i32
    %c0_i32_0 = arith.constant 0 : i32
    %c0_i32_1 = arith.constant 0 : i32
    %c0_i32_2 = arith.constant 0 : i32
    return %c0_i32, %arg0, %c0_i32_0, %c0_i32_1 : i32, i32, i32, i32
  }
  func.func @transform_8(%arg0: i32) -> (i32, i32, i32) {
    %c0_i32 = arith.constant 0 : i32
    %c0_i32_0 = arith.constant 0 : i32
    %c0_i32_1 = arith.constant 0 : i32
    return %arg0, %c0_i32, %c0_i32_0 : i32, i32, i32
  }
}

</mosaic_0001>

<llo_original>
// kernel: tpu_custom_call.1
$region0: #{tpu_custom_call.1}
  #allocation0 [shape = 'u32[]', space=smem, size = 0x4, offset = 0x4, fixed_abs, tag = 'smem constant byte address 0x4 - core index']
  #allocation1 [shape = 'u32[72,128]{1,0:T(1,128)}', space=vmem, size = 0x9000, scoped, tag = 'internal scratch']
  %s0 = inlined_call_operand.vmem [shape: f32[2,16,32], index: 0, kind: input, shape index: {}]
  %s1 = inlined_call_operand.vmem [shape: f32[32,64], index: 1, kind: input, shape index: {}]
  %s2 = inlined_call_operand.vmem [shape: f32[1,64], index: 2, kind: input, shape index: {}]
  %s3 = inlined_call_operand.vmem [shape: f32[64,32], index: 3, kind: input, shape index: {}]
  %s4 = inlined_call_operand.vmem [shape: f32[1,32], index: 4, kind: input, shape index: {}]
  %s5 = inlined_call_operand.vmem [shape: f32[1,32], index: 5, kind: input, shape index: {}]
  %s6 = inlined_call_operand.vmem [shape: f32[1,32], index: 6, kind: input, shape index: {}]
  %s7 = inlined_call_operand.vmem [shape: f32[2,2,32,16], index: 7, kind: output, shape index: {0}]
  %s8 = inlined_call_operand.hbm [shape: f32[2,2,32], index: 8, kind: output, shape index: {1}]
  %9 = xla_tuple %s7, %s8
  %s10 = sld [smem:[#allocation0]]
  $region103: #{tpu_custom_call.1} parent=0
    _
  %s12 = ssub.s32 1, %s10
  %s13 = scalar_select 0, %s12, %s10
  $region1: #{tpu_custom_call.1} parent=0
    #allocation2 [shape = 'u8[65536]{0}', space=vmem, size = 0x10000, scoped, tag = 'output window, operand 0']
    #allocation3 [shape = 'u8[2048]{0}', space=vmem, size = 0x800, scoped, tag = 'output window, operand 1']
    #allocation4 [shape = 's32[2]{0}', space=sflag, size = 0x8, scoped, tag = 'scoped memory for tpu_custom_call.1']
    %14 = vsyncpa [#allocation4], 0
    %s15 = scalar_lea.sflag [#allocation4], 1
    %16 = vsyncpa %s15, 0
    loop: start=0, step=1, limit=4
    $region2: #{tpu_custom_call.1} parent=1 // loop_pre_header
      _
    $region3: #{tpu_custom_call.1} parent=1 // loop_header
      %s18 = sphi 0, %s22
      %p19 = scmp.ge.s32.totalorder %s18, 4
      %s28 = sphi 0, %s30
      %s31 = sphi 0, %s28
      %s32 = sphi 0, %s31
      %s48 = sphi 0, %s32
      %s52 = sphi 0, %s52
      %s54 = sphi 0, %s52
      %s55 = sphi 0, %s54
      %s69 = sphi 0, %s55
      %s73 = sphi 0, %s73
      %s75 = sphi 0, %s73
      %s76 = sphi 0, %s75
      %s90 = sphi 0, %s76
      %s94 = sphi 0, %s94
      %s96 = sphi 0, %s94
      %s97 = sphi 0, %s96
      %s111 = sphi 0, %s97
      %s115 = sphi 0, %s115
      %s117 = sphi 0, %s115
      %s118 = sphi 0, %s117
      %s132 = sphi 0, %s118
      %s136 = sphi 0, %s136
      %s138 = sphi 0, %s136
      %s139 = sphi 0, %s138
      %s153 = sphi 0, %s139
      %s157 = sphi 0, %s157
      %s159 = sphi 0, %s157
      %s160 = sphi 0, %s159
      %s174 = sphi 0, %s160
      %s180 = sphi 0, %s182
      %s183 = sphi 0, %s180
      %s184 = sphi 0, %s183
      %s200 = sphi 0, %s184
      %s206 = sphi 0, %s208
      %s209 = sphi 0, %s206
      %s210 = sphi 0, %s209
      %s226 = sphi 0, %s210
    $region4: #{tpu_custom_call.1} parent=1 // loop_header_branch
      %21 = sbr.rel (%p19) target = $region8
    $region5: #{tpu_custom_call.1} parent=1 // loop_body
      %s23 = ssub.s32 %s18, 1
      %s24 = ssub.s32 %s18, 2
      %s25 = sadd.s32 %s18, 1
      %s26 = ssub.s32 %s18, %s25
      %p27 = scmp.eq.s32.totalorder %s26, 0
      %s29 = sadd.s32 %s28, 1
      %s30 = scalar_select %p27, %s28, %s29
      %p33 = pneg %p27
      %p34 = scmp.eq.s32.totalorder %s18, 1
      %p35 = por %p33, %p34
      %p36 = scmp.ne.s32.totalorder %s28, %s31
      %p37 = scmp.eq.s32.totalorder %s18, 0
      %p38 = por %p36, %p37
      %p39 = scmp.ne.s32.totalorder %s28, %s31
      %p40 = scmp.eq.s32.totalorder %s23, 1
      %p41 = por %p39, %p40
      %p42 = scmp.ne.s32.totalorder %s31, %s32
      %p43 = scmp.eq.s32.totalorder %s23, 0
      %p44 = por %p42, %p43
      %p45 = scmp.ne.s32.totalorder %s31, %s32
      %p46 = scmp.eq.s32.totalorder %s24, 1
      %p47 = por %p45, %p46
      %p49 = scmp.ne.s32.totalorder %s32, %s48
      %p50 = scmp.eq.s32.totalorder %s24, 0
      %p51 = por %p49, %p50
      %s53 = sadd.s32 %s52, 1
      %p56 = scmp.eq.s32.totalorder %s18, 1
      %p57 = scmp.ne.s32.totalorder %s52, %s54
      %p58 = scmp.eq.s32.totalorder %s18, 0
      %p59 = por %p57, %p58
      %p60 = scmp.ne.s32.totalorder %s52, %s54
      %p61 = scmp.eq.s32.totalorder %s23, 1
      %p62 = por %p60, %p61
      %p63 = scmp.ne.s32.totalorder %s54, %s55
      %p64 = scmp.eq.s32.totalorder %s23, 0
      %p65 = por %p63, %p64
      %p66 = scmp.ne.s32.totalorder %s54, %s55
      %p67 = scmp.eq.s32.totalorder %s24, 1
      %p68 = por %p66, %p67
      %p70 = scmp.ne.s32.totalorder %s55, %s69
      %p71 = scmp.eq.s32.totalorder %s24, 0
      %p72 = por %p70, %p71
      %s74 = sadd.s32 %s73, 1
      %p77 = scmp.eq.s32.totalorder %s18, 1
      %p78 = scmp.ne.s32.totalorder %s73, %s75
      %p79 = scmp.eq.s32.totalorder %s18, 0
      %p80 = por %p78, %p79
      %p81 = scmp.ne.s32.totalorder %s73, %s75
      %p82 = scmp.eq.s32.totalorder %s23, 1
      %p83 = por %p81, %p82
      %p84 = scmp.ne.s32.totalorder %s75, %s76
      %p85 = scmp.eq.s32.totalorder %s23, 0
      %p86 = por %p84, %p85
      %p87 = scmp.ne.s32.totalorder %s75, %s76
      %p88 = scmp.eq.s32.totalorder %s24, 1
      %p89 = por %p87, %p88
      %p91 = scmp.ne.s32.totalorder %s76, %s90
      %p92 = scmp.eq.s32.totalorder %s24, 0
      %p93 = por %p91, %p92
      %s95 = sadd.s32 %s94, 1
      %p98 = scmp.eq.s32.totalorder %s18, 1
      %p99 = scmp.ne.s32.totalorder %s94, %s96
      %p100 = scmp.eq.s32.totalorder %s18, 0
      %p101 = por %p99, %p100
      %p102 = scmp.ne.s32.totalorder %s94, %s96
      %p103 = scmp.eq.s32.totalorder %s23, 1
      %p104 = por %p102, %p103
      %p105 = scmp.ne.s32.totalorder %s96, %s97
      %p106 = scmp.eq.s32.totalorder %s23, 0
      %p107 = por %p105, %p106
      %p108 = scmp.ne.s32.totalorder %s96, %s97
      %p109 = scmp.eq.s32.totalorder %s24, 1
      %p110 = por %p108, %p109
      %p112 = scmp.ne.s32.totalorder %s97, %s111
      %p113 = scmp.eq.s32.totalorder %s24, 0
      %p114 = por %p112, %p113
      %s116 = sadd.s32 %s115, 1
      %p119 = scmp.eq.s32.totalorder %s18, 1
      %p120 = scmp.ne.s32.totalorder %s115, %s117
      %p121 = scmp.eq.s32.totalorder %s18, 0
      %p122 = por %p120, %p121
      %p123 = scmp.ne.s32.totalorder %s115, %s117
      %p124 = scmp.eq.s32.totalorder %s23, 1
      %p125 = por %p123, %p124
      %p126 = scmp.ne.s32.totalorder %s117, %s118
      %p127 = scmp.eq.s32.totalorder %s23, 0
      %p128 = por %p126, %p127
      %p129 = scmp.ne.s32.totalorder %s117, %s118
      %p130 = scmp.eq.s32.totalorder %s24, 1
      %p131 = por %p129, %p130
      %p133 = scmp.ne.s32.totalorder %s118, %s132
      %p134 = scmp.eq.s32.totalorder %s24, 0
      %p135 = por %p133, %p134
      %s137 = sadd.s32 %s136, 1
      %p140 = scmp.eq.s32.totalorder %s18, 1
      %p141 = scmp.ne.s32.totalorder %s136, %s138
      %p142 = scmp.eq.s32.totalorder %s18, 0
      %p143 = por %p141, %p142
      %p144 = scmp.ne.s32.totalorder %s136, %s138
      %p145 = scmp.eq.s32.totalorder %s23, 1
      %p146 = por %p144, %p145
      %p147 = scmp.ne.s32.totalorder %s138, %s139
      %p148 = scmp.eq.s32.totalorder %s23, 0
      %p149 = por %p147, %p148
      %p150 = scmp.ne.s32.totalorder %s138, %s139
      %p151 = scmp.eq.s32.totalorder %s24, 1
      %p152 = por %p150, %p151
      %p154 = scmp.ne.s32.totalorder %s139, %s153
      %p155 = scmp.eq.s32.totalorder %s24, 0
      %p156 = por %p154, %p155
      %s158 = sadd.s32 %s157, 1
      %p161 = scmp.eq.s32.totalorder %s18, 1
      %p162 = scmp.ne.s32.totalorder %s157, %s159
      %p163 = scmp.eq.s32.totalorder %s18, 0
      %p164 = por %p162, %p163
      %p165 = scmp.ne.s32.totalorder %s157, %s159
      %p166 = scmp.eq.s32.totalorder %s23, 1
      %p167 = por %p165, %p166
      %p168 = scmp.ne.s32.totalorder %s159, %s160
      %p169 = scmp.eq.s32.totalorder %s23, 0
      %p170 = por %p168, %p169
      %p171 = scmp.ne.s32.totalorder %s159, %s160
      %p172 = scmp.eq.s32.totalorder %s24, 1
      %p173 = por %p171, %p172
      %p175 = scmp.ne.s32.totalorder %s160, %s174
      %p176 = scmp.eq.s32.totalorder %s24, 0
      %p177 = por %p175, %p176
      %s178 = ssub.s32 %s18, %s25
      %p179 = scmp.eq.s32.totalorder %s178, 0
      %s181 = sadd.s32 %s180, 1
      %s182 = scalar_select %p179, %s180, %s181
      %p185 = pneg %p179
      %p186 = scmp.eq.s32.totalorder %s18, 1
      %p187 = por %p185, %p186
      %p188 = scmp.ne.s32.totalorder %s180, %s183
      %p189 = scmp.eq.s32.totalorder %s18, 0
      %p190 = por %p188, %p189
      %p191 = scmp.ne.s32.totalorder %s180, %s183
      %p192 = scmp.eq.s32.totalorder %s23, 1
      %p193 = por %p191, %p192
      %p194 = scmp.ne.s32.totalorder %s183, %s184
      %p195 = scmp.eq.s32.totalorder %s23, 0
      %p196 = por %p194, %p195
      %p197 = scmp.ne.s32.totalorder %s183, %s184
      %p198 = scmp.eq.s32.totalorder %s24, 1
      %p199 = por %p197, %p198
      %p201 = scmp.ne.s32.totalorder %s184, %s200
      %p202 = scmp.eq.s32.totalorder %s24, 0
      %p203 = por %p201, %p202
      %s204 = ssub.s32 %s18, %s25
      %p205 = scmp.eq.s32.totalorder %s204, 0
      %s207 = sadd.s32 %s206, 1
      %s208 = scalar_select %p205, %s206, %s207
      %p211 = pneg %p205
      %p212 = scmp.eq.s32.totalorder %s18, 1
      %p213 = por %p211, %p212
      %p214 = scmp.ne.s32.totalorder %s206, %s209
      %p215 = scmp.eq.s32.totalorder %s18, 0
      %p216 = por %p214, %p215
      %p217 = scmp.ne.s32.totalorder %s206, %s209
      %p218 = scmp.eq.s32.totalorder %s23, 1
      %p219 = por %p217, %p218
      %p220 = scmp.ne.s32.totalorder %s209, %s210
      %p221 = scmp.eq.s32.totalorder %s23, 0
      %p222 = por %p220, %p221
      %p223 = scmp.ne.s32.totalorder %s209, %s210
      %p224 = scmp.eq.s32.totalorder %s24, 1
      %p225 = por %p223, %p224
      %p227 = scmp.ne.s32.totalorder %s210, %s226
      %p228 = scmp.eq.s32.totalorder %s24, 0
      %p229 = por %p227, %p228
      %p230 = scmp.le.s32.totalorder 1, %s18
      %p231 = scmp.lt.s32.totalorder %s18, 3
      %p232 = pnand %p230, %p231
      %p233 = pneg %p232
      // Predicated region
      $region9: #{tpu_custom_call.1} parent=5 // pred_check
        _
      $region10: #{tpu_custom_call.1} parent=5 // pred_check_branch
        %235 = sbr.rel (%p232) target = $region12
      $region11: #{tpu_custom_call.1} parent=5 // pred_region
        %s236 = ssub.s32 %s18, 1
        // Predicated region
        $region13: #{tpu_custom_call.1} parent=11 // pred_check
          %p237 = pneg %p65
        $region14: #{tpu_custom_call.1} parent=11 // pred_check_branch
          %239 = sbr.rel (%p237) target = $region16
        $region15: #{tpu_custom_call.1} parent=11 // pred_region
          _
        $region16: #{tpu_custom_call.1} parent=11 // pred_fallthru
          _
        // Predicated region
        $region17: #{tpu_custom_call.1} parent=11 // pred_check
          %p240 = pneg %p86
        $region18: #{tpu_custom_call.1} parent=11 // pred_check_branch
          %242 = sbr.rel (%p240) target = $region20
        $region19: #{tpu_custom_call.1} parent=11 // pred_region
          _
        $region20: #{tpu_custom_call.1} parent=11 // pred_fallthru
          _
        // Predicated region
        $region21: #{tpu_custom_call.1} parent=11 // pred_check
          %p243 = pneg %p107
        $region22: #{tpu_custom_call.1} parent=11 // pred_check_branch
          %245 = sbr.rel (%p243) target = $region24
        $region23: #{tpu_custom_call.1} parent=11 // pred_region
          _
        $region24: #{tpu_custom_call.1} parent=11 // pred_fallthru
          _
        // Predicated region
        $region25: #{tpu_custom_call.1} parent=11 // pred_check
          %p246 = pneg %p128
        $region26: #{tpu_custom_call.1} parent=11 // pred_check_branch
          %248 = sbr.rel (%p246) target = $region28
        $region27: #{tpu_custom_call.1} parent=11 // pred_region
          _
        $region28: #{tpu_custom_call.1} parent=11 // pred_fallthru
          _
        // Predicated region
        $region29: #{tpu_custom_call.1} parent=11 // pred_check
          %p249 = pneg %p149
        $region30: #{tpu_custom_call.1} parent=11 // pred_check_branch
          %251 = sbr.rel (%p249) target = $region32
        $region31: #{tpu_custom_call.1} parent=11 // pred_region
          _
        $region32: #{tpu_custom_call.1} parent=11 // pred_fallthru
          _
        // Predicated region
        $region33: #{tpu_custom_call.1} parent=11 // pred_check
          %p252 = pneg %p170
        $region34: #{tpu_custom_call.1} parent=11 // pred_check_branch
          %254 = sbr.rel (%p252) target = $region36
        $region35: #{tpu_custom_call.1} parent=11 // pred_region
          _
        $region36: #{tpu_custom_call.1} parent=11 // pred_fallthru
          _
      $region12: #{tpu_custom_call.1} parent=5 // pred_fallthru
        _
      %p255 = scmp.lt.s32.totalorder %s18, 2
      // Predicated region
      $region37: #{tpu_custom_call.1} parent=5 // pred_check
        %p256 = pneg %p255
      $region38: #{tpu_custom_call.1} parent=5 // pred_check_branch
        %258 = sbr.rel (%p256) target = $region40
      $region39: #{tpu_custom_call.1} parent=5 // pred_region
        // Predicated region
        $region41: #{tpu_custom_call.1} parent=39 // pred_check
          %p259 = pneg %p38
        $region42: #{tpu_custom_call.1} parent=39 // pred_check_branch
          %261 = sbr.rel (%p259) target = $region44
        $region43: #{tpu_custom_call.1} parent=39 // pred_region
          %p262 = scmp.lt.s32.totalorder %s18, 1
          %s263 = scalar_select %p262, %s18, 1
          %s264 = smul.addr %s263, 2
          %s265 = smul.addr %s264, 8
          %s266 = scalar_lea.vmem %s0, %s265
        $region44: #{tpu_custom_call.1} parent=39 // pred_fallthru
          _
      $region40: #{tpu_custom_call.1} parent=5 // pred_fallthru
        _
      %p267 = scmp.le.s32.totalorder 1, %s18
      %p268 = scmp.lt.s32.totalorder %s18, 3
      %p269 = pnand %p267, %p268
      %p270 = pneg %p269
      // Predicated region
      $region45: #{tpu_custom_call.1} parent=5 // pred_check
        _
      $region46: #{tpu_custom_call.1} parent=5 // pred_check_branch
        %272 = sbr.rel (%p269) target = $region48
      $region47: #{tpu_custom_call.1} parent=5 // pred_region
        %s273 = ssub.s32 %s18, 1
        %p274 = scmp.lt.s32.totalorder %s23, 1
        %s275 = scalar_select %p274, %s23, 1
        %s276 = smul.addr %s275, 2
        %s277 = smul.addr %s276, 8
        %s278 = scalar_lea.vmem %s0, %s277
        %p279 = pneg %p44
        %p280 = pneg %p41
        %p281 = pneg %p65
        %p282 = pneg %p62
        %p283 = pneg %p86
        %p284 = pneg %p83
        %p285 = pneg %p107
        %p286 = pneg %p104
        %p287 = pneg %p128
        %p288 = pneg %p125
        %p289 = pneg %p149
        %p290 = pneg %p146
        %p291 = pneg %p170
        %p292 = pneg %p167
        %p293 = pneg %p196
        %p294 = pneg %p193
        %s295 = sand.u32 %s183, 1
        %s296 = sand.u32 %s183, 1
        %s297 = smul.addr %s296, 64
        %s298 = scalar_lea.vmem [#allocation2], %s297
        %p299 = pneg %p222
        %p300 = pneg %p219
        %s301 = sand.u32 %s209, 1
        %s302 = scalar_lea.sflag [#allocation4], %s301
        %s303 = sand.u32 %s209, 1
        %s304 = smul.addr %s303, 2
        %s305 = scalar_lea.vmem [#allocation3], %s304
        %p306 = scmp.lt.s32.totalorder %s23, 1
        %s307 = scalar_select %p306, %s23, 1
        %s308 = smul.addr %s307, 2
        %s309 = smul.addr %s308, 8
        %s310 = scalar_lea.vmem %s0, %s309
        %v311 = vld [vmem:[%s310] sm:$0xff]
        %v312 = vld [vmem:[%s310 + $0x8] sm:$0xff]
        %vm313 = vcmask 261120
        %v314 = vsel %vm313, %v311, 0.0
        %v315 = vsel %vm313, %v312, 0.0
        %v316 = vadd.f32 %v314, %v315
        %v317 = vrot.slane %v316, 4
        %v318 = vadd.f32 %v316, %v317
        %v319 = vrot.slane %v318, 2
        %v320 = vadd.f32 %v318, %v319
        %v321 = vrot.slane %v320, 1
        %v322 = vadd.f32 %v320, %v321
        %v323 = vrcp.pop 16.0
        %v324 = vmul.f32 16.0, %v323
        %v325 = vsub.f32 1.0, %v324
        %v326 = vmul.f32 %v323, %v325
        %v327 = vadd.f32 %v323, %v326
        %vm328 = vweird.f32 %v323
        %v329 = vsel %vm328, %v323, %v327
        %v330 = vmul.f32 %v322, %v329
        %v331 = vsub.f32 %v311, %v330
        %v332 = vsub.f32 %v312, %v330
        %v333 = vmul.f32 %v331, %v331
        %v334 = vmul.f32 %v332, %v332
        %v335 = vsel %vm313, %v333, 0.0
        %v336 = vsel %vm313, %v334, 0.0
        %v337 = vadd.f32 %v335, %v336
        %v338 = vrot.slane %v337, 4
        %v339 = vadd.f32 %v337, %v338
        %v340 = vrot.slane %v339, 2
        %v341 = vadd.f32 %v339, %v340
        %v342 = vrot.slane %v341, 1
        %v343 = vadd.f32 %v341, %v342
        %v344 = vmul.f32 %v343, %v329
        %v345 = vrsqrt.pop %v344
        %v346 = vmul.f32 %v345, %v344
        %v347 = vmul.f32 %v346, %v345
        %v348 = vmul.f32 0.5, %v347
        %v349 = vsub.f32 1.5, %v348
        %v350 = vmul.f32 %v345, %v349
        %v351 = vmul.f32 %v344, %v350
        %vm352 = vcmp.eq.f32.partialorder %v344, inf
        %v353 = vsel %vm352, %v344, %v351
        %vm354 = vcmp.eq.f32.partialorder %v344, 0.0
        %v355 = vand.u32 %v344, 2147483648
        %v356 = vsel %vm354, %v355, %v353
        %v357 = vmax.f32 %v356, 0.01
        %v358 = vmax.f32 %v344, 0.0001
        %v359 = vrsqrt.pop %v358
        %v360 = vmul.f32 %v359, %v358
        %v361 = vmul.f32 %v360, %v359
        %v362 = vmul.f32 0.5, %v361
        %v363 = vsub.f32 1.5, %v362
        %v364 = vmul.f32 %v359, %v363
        %vm365 = vweird.f32 %v358
        %vm366 = vweird.f32 %v359
        %vm367 = vmor %vm365, %vm366
        %v368 = vsel %vm367, %v359, %v364
        %v369 = vmul.f32 %v331, %v368
        %v370 = vmul.f32 %v332, %v368
        %v371 = vld [vmem:[%s1] sm:$0xff]
        %v372 = vld [vmem:[%s1 + $0x8] sm:$0xff]
        %v373 = vld [vmem:[%s1 + $0x10] sm:$0xff]
        %v374 = vld [vmem:[%s1 + $0x18] sm:$0xff]
        %v375 = vld [vmem:[%s3] sm:$0xff]
        %v376 = vld [vmem:[%s3 + $0x8] sm:$0xff]
        %v377 = vld [vmem:[%s3 + $0x10] sm:$0xff]
        %v378 = vld [vmem:[%s3 + $0x18] sm:$0xff]
        %v379 = vld [vmem:[%s3 + $0x20] sm:$0xff]
        %v380 = vld [vmem:[%s3 + $0x28] sm:$0xff]
        %v381 = vld [vmem:[%s3 + $0x30] sm:$0xff]
        %v382 = vld [vmem:[%s3 + $0x38] sm:$0xff]
        %v383 = vld [vmem:[%s2] sm:$0x1]
        %v385 = vperm.slane %v383, 0
        %v388 = vsel %vm313, %v369, 0
        %v391 = vsel %vm313, %v370, 0
        %393 = vmatpush.msra.mxu0 0.0
        %394 = vmatpush.msra.mxu0 0.0
        %395 = vmatpush.msra.mxu0 0.0
        %396 = vmatpush.msra.mxu0 0.0
        %397 = vmatpush.msra.mxu0 0.0
        %398 = vmatpush.msra.mxu0 0.0
        %399 = vmatpush.msra.mxu0 0.0
        %400 = vmatpush.msra.mxu0 0.0
        %401 = vmatpush.msra.mxu0 0.0
        %402 = vmatpush.msra.mxu0 0.0
        %403 = vmatpush.msra.mxu0 0.0
        %404 = vmatpush.msra.mxu0 0.0
        %405 = vmatpush.msra.mxu0 %v374
        %406 = vmatpush.msra.mxu0 %v373
        %407 = vmatpush.msra.mxu0 %v372
        %408 = vmatpush.msra.mxu0 %v371
        %409 = vmatmul.f32.gmra.mxu0 %v388
        %v410 = vpop.f32.mrf.mxu0
        %v411 = vadd.f32 %v385, %v410
        %412 = vmatmul.f32.gmra.mxu0 %v391
        %v413 = vpop.f32.mrf.mxu0
        %v414 = vadd.f32 %v385, %v413
        %415 = vdwg.mxu0
        %v416 = vxor.u32 %v411, 2147483648
        %v417 = vxor.u32 %v414, 2147483648
        %v418 = vmul.f32 %v416, 1.442695
        %v419 = vpow.pop %v418
        %v420 = vmul.f32 %v417, 1.442695
        %v421 = vpow.pop %v420
        %v422 = vadd.f32 %v419, 1.0
        %v423 = vadd.f32 %v421, 1.0
        %v424 = vrcp.pop %v422
        %v425 = vmul.f32 %v422, %v424
        %v426 = vsub.f32 1.0, %v425
        %v427 = vmul.f32 %v424, %v426
        %v428 = vadd.f32 %v424, %v427
        %vm429 = vweird.f32 %v422
        %vm430 = vweird.f32 %v424
        %vm431 = vmor %vm429, %vm430
        %v432 = vsel %vm431, %v424, %v428
        %v433 = vand.u32 2147483647, %v422
        %vm434 = vcmp.eq.f32.partialorder %v433, 8.507059e+37
        %v435 = vand.u32 %v422, 2147483648
        %v436 = vor.u32 1.1754944e-38, %v435
        %v437 = vsel %vm434, %v436, %v432
        %v438 = vmul.f32 1.0, %v437
        %v439 = vrcp.pop %v423
        %v440 = vmul.f32 %v423, %v439
        %v441 = vsub.f32 1.0, %v440
        %v442 = vmul.f32 %v439, %v441
        %v443 = vadd.f32 %v439, %v442
        %vm444 = vweird.f32 %v423
        %vm445 = vweird.f32 %v439
        %vm446 = vmor %vm444, %vm445
        %v447 = vsel %vm446, %v439, %v443
        %v448 = vand.u32 2147483647, %v423
        %vm449 = vcmp.eq.f32.partialorder %v448, 8.507059e+37
        %v450 = vand.u32 %v423, 2147483648
        %v451 = vor.u32 1.1754944e-38, %v450
        %v452 = vsel %vm449, %v451, %v447
        %v453 = vmul.f32 1.0, %v452
        %v454 = vmul.f32 %v411, %v438
        %v455 = vmul.f32 %v414, %v453
        %v456 = vld [vmem:[%s4] sm:$0x1]
        %v458 = vperm.slane %v456, 0
        %vm460 = vcmask 523264
        %v462 = vsel %vm460, %v454, 0
        %v465 = vsel %vm460, %v455, 0
        %467 = vmatpush.msra.mxu0 0.0
        %468 = vmatpush.msra.mxu0 0.0
        %469 = vmatpush.msra.mxu0 0.0
        %470 = vmatpush.msra.mxu0 0.0
        %471 = vmatpush.msra.mxu0 0.0
        %472 = vmatpush.msra.mxu0 0.0
        %473 = vmatpush.msra.mxu0 0.0
        %474 = vmatpush.msra.mxu0 0.0
        %475 = vmatpush.msra.mxu0 %v382
        %476 = vmatpush.msra.mxu0 %v381
        %477 = vmatpush.msra.mxu0 %v380
        %478 = vmatpush.msra.mxu0 %v379
        %479 = vmatpush.msra.mxu0 %v378
        %480 = vmatpush.msra.mxu0 %v377
        %481 = vmatpush.msra.mxu0 %v376
        %482 = vmatpush.msra.mxu0 %v375
        %483 = vmatmul.f32.gmra.mxu0 %v462
        %v484 = vpop.f32.mrf.mxu0
        %v485 = vadd.f32 %v458, %v484
        %486 = vmatmul.f32.gmra.mxu0 %v465
        %v487 = vpop.f32.mrf.mxu0
        %v488 = vadd.f32 %v458, %v487
        %489 = vdwg.mxu0
        %v490 = vld [vmem:[%s5] sm:$0x1]
        %v491 = vld [vmem:[%s6] sm:$0x1]
        %v493 = vperm.slane %v490, 0
        %v495 = vmul.f32 %v493, %v369
        %v496 = vmul.f32 %v493, %v370
        %v497 = vadd.f32 %v495, %v485
        %v498 = vadd.f32 %v496, %v488
        %v499 = vsub.f32 0.0, %v491
        %v501 = vperm.slane %v499, 0
        %v503 = vmul.f32 %v501, %v369
        %v504 = vmul.f32 %v501, %v370
        %v505 = vadd.f32 %v503, %v485
        %v506 = vadd.f32 %v504, %v488
        %507 = vxpose.xlu0.b32.start [1/16] %v497, 128
        %508 = vxpose.xlu0.b32.cont [2/16] %v498, 128
        %509 = vxpose.xlu0.b32.cont [3/16] 0.0, 128
        %510 = vxpose.xlu0.b32.cont [4/16] 0.0, 128
        %511 = vxpose.xlu0.b32.cont [5/16] 0.0, 128
        %512 = vxpose.xlu0.b32.cont [6/16] 0.0, 128
        %513 = vxpose.xlu0.b32.cont [7/16] 0.0, 128
        %514 = vxpose.xlu0.b32.cont [8/16] 0.0, 128
        %515 = vxpose.xlu0.b32.cont [9/16] 0.0, 128
        %516 = vxpose.xlu0.b32.cont [10/16] 0.0, 128
        %517 = vxpose.xlu0.b32.cont [11/16] 0.0, 128
        %518 = vxpose.xlu0.b32.cont [12/16] 0.0, 128
        %519 = vxpose.xlu0.b32.cont [13/16] 0.0, 128
        %520 = vxpose.xlu0.b32.cont [14/16] 0.0, 128
        %521 = vxpose.xlu0.b32.cont [15/16] 0.0, 128
        %522 = vxpose.xlu0.b32.end [16/16] 0.0, 128
        %v523 = vpop.trf.xlu0
        %v524 = vpop.trf.xlu0
        %v525 = vpop.trf.xlu0
        %v526 = vpop.trf.xlu0
        %v527 = vpop.trf.xlu0
        %v528 = vpop.trf.xlu0
        %v529 = vpop.trf.xlu0
        %v530 = vpop.trf.xlu0
        %v531 = vpop.trf.xlu0
        %v532 = vpop.trf.xlu0
        %v533 = vpop.trf.xlu0
        %v534 = vpop.trf.xlu0
        %v535 = vpop.trf.xlu0
        %v536 = vpop.trf.xlu0
        %v537 = vpop.trf.xlu0
        %v538 = vpop.trf.xlu0
        %vm539 = vcmask 130048
        %540 = vst.msk [vmem:[%s298] sm:$0xff] %vm539, %v523
        %541 = vst.msk [vmem:[%s298 + $0x8] sm:$0xff] %vm539, %v524
        %542 = vst.msk [vmem:[%s298 + $0x10] sm:$0xff] %vm539, %v525
        %543 = vst.msk [vmem:[%s298 + $0x18] sm:$0xff] %vm539, %v526
        %544 = vxpose.xlu0.b32.start [1/16] %v505, 128
        %545 = vxpose.xlu0.b32.cont [2/16] %v506, 128
        %546 = vxpose.xlu0.b32.cont [3/16] 0.0, 128
        %547 = vxpose.xlu0.b32.cont [4/16] 0.0, 128
        %548 = vxpose.xlu0.b32.cont [5/16] 0.0, 128
        %549 = vxpose.xlu0.b32.cont [6/16] 0.0, 128
        %550 = vxpose.xlu0.b32.cont [7/16] 0.0, 128
        %551 = vxpose.xlu0.b32.cont [8/16] 0.0, 128
        %552 = vxpose.xlu0.b32.cont [9/16] 0.0, 128
        %553 = vxpose.xlu0.b32.cont [10/16] 0.0, 128
        %554 = vxpose.xlu0.b32.cont [11/16] 0.0, 128
        %555 = vxpose.xlu0.b32.cont [12/16] 0.0, 128
        %556 = vxpose.xlu0.b32.cont [13/16] 0.0, 128
        %557 = vxpose.xlu0.b32.cont [14/16] 0.0, 128
        %558 = vxpose.xlu0.b32.cont [15/16] 0.0, 128
        %559 = vxpose.xlu0.b32.end [16/16] 0.0, 128
        %v560 = vpop.trf.xlu0
        %v561 = vpop.trf.xlu0
        %v562 = vpop.trf.xlu0
        %v563 = vpop.trf.xlu0
        %v564 = vpop.trf.xlu0
        %v565 = vpop.trf.xlu0
        %v566 = vpop.trf.xlu0
        %v567 = vpop.trf.xlu0
        %v568 = vpop.trf.xlu0
        %v569 = vpop.trf.xlu0
        %v570 = vpop.trf.xlu0
        %v571 = vpop.trf.xlu0
        %v572 = vpop.trf.xlu0
        %v573 = vpop.trf.xlu0
        %v574 = vpop.trf.xlu0
        %v575 = vpop.trf.xlu0
        %s576 = scalar_lea.vmem %s298, 32 [#allocation2]
        %577 = vst.msk [vmem:[%s576] sm:$0xff] %vm539, %v560
        %578 = vst.msk [vmem:[%s576 + $0x8] sm:$0xff] %vm539, %v561
        %579 = vst.msk [vmem:[%s576 + $0x10] sm:$0xff] %vm539, %v562
        %580 = vst.msk [vmem:[%s576 + $0x18] sm:$0xff] %vm539, %v563
        %vm581 = vcmask 253952
        %582 = vst.msk [vmem:[%s305] sm:$0x1] %vm581, %v330
        %583 = vst.msk [vmem:[%s305 + $0x1] sm:$0x1] %vm581, %v357
        %s584 = sand.u32 %s183, 1
        %s585 = sand.u32 %s183, 1
        %s586 = smul.addr %s585, 64
        %s587 = scalar_lea.vmem [#allocation2], %s586
        %s588 = sand.u32 %s209, 1
        %s589 = scalar_lea.sflag [#allocation4], %s588
        %s590 = sand.u32 %s209, 1
        %s591 = smul.addr %s590, 2
        %s592 = scalar_lea.vmem [#allocation3], %s591
        // Predicated region
        $region49: #{tpu_custom_call.1} parent=47 // pred_check
          %p593 = pneg %p193
        $region50: #{tpu_custom_call.1} parent=47 // pred_check_branch
          %595 = sbr.rel (%p593) target = $region52
        $region51: #{tpu_custom_call.1} parent=47 // pred_region
          %s596 = smul.addr %s23, 4
          %s597 = smul.addr %s596, 8
          %s598 = scalar_lea.vmem %s7, %s597
          // Predicated region
          $region53: #{tpu_custom_call.1} parent=51 // pred_check
            _
          $region54: #{tpu_custom_call.1} parent=51 // pred_check_branch
            %600 = sbr.rel (0) target = $region56
          $region55: #{tpu_custom_call.1} parent=51 // pred_region
            // Predicated region
            $region57: #{tpu_custom_call.1} parent=55 // pred_check
              _
            $region58: #{tpu_custom_call.1} parent=55 // pred_check_branch
              %602 = sbr.rel (0) target = $region60
            $region59: #{tpu_custom_call.1} parent=55 // pred_region
              // Predicated region
              $region72: #{tpu_custom_call.1} parent=59 // pred_check
                _
              $region73: #{tpu_custom_call.1} parent=59 // pred_check_branch
                %632 = sbr.rel (0) target = $region75
              $region74: #{tpu_custom_call.1} parent=59 // pred_region
                loop: start=0, step=1, limit=1
                $region76: #{tpu_custom_call.1} parent=74 // loop_pre_header
                  _
                $region77: #{tpu_custom_call.1} parent=74 // loop_header
                  %s634 = sphi 0, %s638
                  %p635 = scmp.ge.s32.totalorder %s634, 1
                  %s639 = sphi %s587, %s587
                  %s640 = sphi %s598, %s598
                $region78: #{tpu_custom_call.1} parent=74 // loop_header_branch
                  %637 = sbr.rel (%p635) target = $region82
                $region79: #{tpu_custom_call.1} parent=74 // loop_body
                  %v641 = vld [vmem:[%s639] sm:$0xff]
                  %642 = vst [vmem:[%s640] sm:$0xff] %v641
                  %v643 = vld [vmem:[%s639 + $0x8] sm:$0xff]
                  %644 = vst [vmem:[%s640 + $0x8] sm:$0xff] %v643
                  %v645 = vld [vmem:[%s639 + $0x10] sm:$0xff]
                  %646 = vst [vmem:[%s640 + $0x10] sm:$0xff] %v645
                  %v647 = vld [vmem:[%s639 + $0x18] sm:$0xff]
                  %648 = vst [vmem:[%s640 + $0x18] sm:$0xff] %v647
                  %v649 = vld [vmem:[%s639 + $0x20] sm:$0xff]
                  %650 = vst [vmem:[%s640 + $0x40] sm:$0xff] %v649
                  %v651 = vld [vmem:[%s639 + $0x28] sm:$0xff]
                  %652 = vst [vmem:[%s640 + $0x48] sm:$0xff] %v651
                  %v653 = vld [vmem:[%s639 + $0x30] sm:$0xff]
                  %654 = vst [vmem:[%s640 + $0x50] sm:$0xff] %v653
                  %v655 = vld [vmem:[%s639 + $0x38] sm:$0xff]
                  %656 = vst [vmem:[%s640 + $0x58] sm:$0xff] %v655
                $region80: #{tpu_custom_call.1} parent=74 // loop_footer
                  %s638 = sadd.s32 1, %s634
                $region81: #{tpu_custom_call.1} parent=74 // loop_footer_branch
                  %633 = sbr.rel target = $region77
                $region82: #{tpu_custom_call.1} parent=74 // loop_exit
                  _
              $region75: #{tpu_custom_call.1} parent=59 // pred_fallthru
                _
              // Predicated region
              $region83: #{tpu_custom_call.1} parent=59 // pred_check
                _
              $region84: #{tpu_custom_call.1} parent=59 // pred_check_branch
                %658 = sbr.rel target = $region86
              $region85: #{tpu_custom_call.1} parent=59 // pred_region
                _
              $region86: #{tpu_custom_call.1} parent=59 // pred_fallthru
                _
            $region60: #{tpu_custom_call.1} parent=55 // pred_fallthru
              _
            // Predicated region
            $region61: #{tpu_custom_call.1} parent=55 // pred_check
              _
            $region62: #{tpu_custom_call.1} parent=55 // pred_check_branch
              %604 = sbr.rel target = $region64
            $region63: #{tpu_custom_call.1} parent=55 // pred_region
              %s606 = ssub.s32 256, 1
              loop: start=0, step=1, limit=1
              $region65: #{tpu_custom_call.1} parent=63 // loop_pre_header
                _
              $region66: #{tpu_custom_call.1} parent=63 // loop_header
                %s608 = sphi 0, %s612
                %p609 = scmp.ge.s32.totalorder %s608, 1
                %s613 = sphi %s587, %s587
                %s614 = sphi %s598, %s598
              $region67: #{tpu_custom_call.1} parent=63 // loop_header_branch
                %611 = sbr.rel (%p609) target = $region71
              $region68: #{tpu_custom_call.1} parent=63 // loop_body
                %v615 = vld [vmem:[%s613] sm:%s606]
                %616 = vst [vmem:[%s614] sm:%s606] %v615
                %v617 = vld [vmem:[%s613 + $0x8] sm:%s606]
                %618 = vst [vmem:[%s614 + $0x8] sm:%s606] %v617
                %v619 = vld [vmem:[%s613 + $0x10] sm:%s606]
                %620 = vst [vmem:[%s614 + $0x10] sm:%s606] %v619
                %v621 = vld [vmem:[%s613 + $0x18] sm:%s606]
                %622 = vst [vmem:[%s614 + $0x18] sm:%s606] %v621
                %v623 = vld [vmem:[%s613 + $0x20] sm:%s606]
                %624 = vst [vmem:[%s614 + $0x40] sm:%s606] %v623
                %v625 = vld [vmem:[%s613 + $0x28] sm:%s606]
                %626 = vst [vmem:[%s614 + $0x48] sm:%s606] %v625
                %v627 = vld [vmem:[%s613 + $0x30] sm:%s606]
                %628 = vst [vmem:[%s614 + $0x50] sm:%s606] %v627
                %v629 = vld [vmem:[%s613 + $0x38] sm:%s606]
                %630 = vst [vmem:[%s614 + $0x58] sm:%s606] %v629
              $region69: #{tpu_custom_call.1} parent=63 // loop_footer
                %s612 = sadd.s32 1, %s608
              $region70: #{tpu_custom_call.1} parent=63 // loop_footer_branch
                %607 = sbr.rel target = $region66
              $region71: #{tpu_custom_call.1} parent=63 // loop_exit
                _
            $region64: #{tpu_custom_call.1} parent=55 // pred_fallthru
              _
          $region56: #{tpu_custom_call.1} parent=51 // pred_fallthru
            _
          %659 = vnop
        $region52: #{tpu_custom_call.1} parent=47 // pred_fallthru
          _
        // Predicated region
        $region87: #{tpu_custom_call.1} parent=47 // pred_check
          %p660 = pneg %p219
        $region88: #{tpu_custom_call.1} parent=47 // pred_check_branch
          %662 = sbr.rel (%p660) target = $region90
        $region89: #{tpu_custom_call.1} parent=47 // pred_region
          %664 = vsyncadd %s589, 0
          %s665 = smul.addr %s23, 2
          %s666 = scalar_lea.hbm %s8, %s665
          %s668 = sshll.u32 %s592, 4
          %s669 = int_to_ptr.vmem [resolvable:$true] %s668
          %s670 = sshll.u32 %s666, 4
          %s671 = int_to_ptr.hbm [resolvable:$true] %s670
          %673 = dma.vmem_to_hbm [thread:$0]  %s669, 32, %s671, %s589
        $region90: #{tpu_custom_call.1} parent=47 // pred_fallthru
          _
      $region48: #{tpu_custom_call.1} parent=5 // pred_fallthru
        _
      %p674 = scmp.le.s32.totalorder 2, %s18
      // Predicated region
      $region91: #{tpu_custom_call.1} parent=5 // pred_check
        %p675 = pneg %p674
      $region92: #{tpu_custom_call.1} parent=5 // pred_check_branch
        %677 = sbr.rel (%p675) target = $region94
      $region93: #{tpu_custom_call.1} parent=5 // pred_region
        %s678 = ssub.s32 %s18, 2
        // Predicated region
        $region95: #{tpu_custom_call.1} parent=93 // pred_check
          %p679 = pneg %p199
        $region96: #{tpu_custom_call.1} parent=93 // pred_check_branch
          %681 = sbr.rel (%p679) target = $region98
        $region97: #{tpu_custom_call.1} parent=93 // pred_region
          %s682 = sand.u32 %s184, 1
          %s683 = sand.u32 %s184, 1
          %s684 = smul.addr %s683, 64
          %s685 = scalar_lea.vmem [#allocation2], %s684
        $region98: #{tpu_custom_call.1} parent=93 // pred_fallthru
          _
        // Predicated region
        $region99: #{tpu_custom_call.1} parent=93 // pred_check
          %p686 = pneg %p225
        $region100: #{tpu_custom_call.1} parent=93 // pred_check_branch
          %688 = sbr.rel (%p686) target = $region102
        $region101: #{tpu_custom_call.1} parent=93 // pred_region
          %s689 = sand.u32 %s210, 1
          %s690 = scalar_lea.sflag [#allocation4], %s689
          %s691 = sand.u32 %s210, 1
          %s692 = smul.addr %s691, 2
          %s693 = scalar_lea.vmem [#allocation3], %s692
          %695 = dma.done %s690, 32
        $region102: #{tpu_custom_call.1} parent=93 // pred_fallthru
          _
      $region94: #{tpu_custom_call.1} parent=5 // pred_fallthru
        _
    $region6: #{tpu_custom_call.1} parent=1 // loop_footer
      %s22 = sadd.s32 1, %s18
    $region7: #{tpu_custom_call.1} parent=1 // loop_footer_branch
      %17 = sbr.rel target = $region3
    $region8: #{tpu_custom_call.1} parent=1 // loop_exit
      _
    %696 = vsyncpa [#allocation4], 1
    %s697 = scalar_lea.sflag [#allocation4], 1
    %698 = vsyncpa %s697, 1

</llo_original>
